<compile_context>
chip_gen: v7x
topology: tpu7x:2x2x1
jax: 0.10.0
libtpu: 0.0.40
codegen_flags: <defaults>
</compile_context>

<pallas_src>
import functools

import jax
import jax.numpy as jnp
from jax.experimental import pallas as pl
from jax.experimental.pallas import tpu as pltpu


_VMEM_LIMIT_BYTES = 32 * 1024 * 1024     # explicit scoped-VMEM request (all gens)
_TARGET_BLOCK_BYTES = 4 * 1024 * 1024    # per-block target; ~4x when double-buffered
_MAX_BLOCK_BYTES = 8 * 1024 * 1024       # above this, use the column-tiled fallback


# ---------------------------------------------------------------------------
# Main path: one block holds TB complete rows (lane dim == full N, unpadded).
# ---------------------------------------------------------------------------
def _norm_rows_kernel(x_ref, o_ref):
    x = x_ref[...].astype(jnp.float32)
    row_min = jnp.min(x, axis=1, keepdims=True)
    row_max = jnp.max(x, axis=1, keepdims=True)
    # max(x - m) == max(x) - m exactly, so reciprocal+multiply matches the
    # PyTorch two-step formulation to ~1 ulp.
    inv_range = 1.0 / (row_max - row_min)
    o_ref[...] = ((x - row_min) * inv_range).astype(o_ref.dtype)


# ---------------------------------------------------------------------------
# Fallback path (huge N): column-tiled two-pass (reduce, then normalize).
# ---------------------------------------------------------------------------
def _minmax_kernel(x_ref, min_ref, max_ref, *, n_total, col_block):
    j = pl.program_id(1)
    last = pl.num_programs(1) - 1

    @pl.when(j == 0)
    def _init():
        min_ref[...] = jnp.full_like(min_ref, jnp.inf)
        max_ref[...] = jnp.full_like(max_ref, -jnp.inf)

    x = x_ref[...].astype(jnp.float32)
    tail = n_total % col_block

    def _update(x_for_min, x_for_max):
        min_ref[...] = jnp.minimum(
            min_ref[...], jnp.min(x_for_min, axis=1, keepdims=True))
        max_ref[...] = jnp.maximum(
            max_ref[...], jnp.max(x_for_max, axis=1, keepdims=True))

    if tail == 0:
        _update(x, x)
    else:
        # Only the final (partial) column block pays for the masked selects.
        @pl.when(j != last)
        def _dense():
            _update(x, x)

        @pl.when(j == last)
        def _masked():
            col = jax.lax.broadcasted_iota(jnp.int32, x.shape, 1)
            mask = col < tail
            _update(jnp.where(mask, x, jnp.inf), jnp.where(mask, x, -jnp.inf))


def _apply_kernel(x_ref, min_ref, max_ref, o_ref):
    x = x_ref[...].astype(jnp.float32)
    mn = min_ref[...]
    inv_range = 1.0 / (max_ref[...] - mn)
    o_ref[...] = ((x - mn) * inv_range).astype(o_ref.dtype)


def _two_pass_norm(flat, tb, cb, vmem_limit):
    B, N = flat.shape
    row_tiles = pl.cdiv(B, tb)
    col_tiles = pl.cdiv(N, cb)

    mins, maxs = pl.pallas_call(
        functools.partial(_minmax_kernel, n_total=N, col_block=cb),
        out_shape=(jax.ShapeDtypeStruct((B, 1), jnp.float32),
                   jax.ShapeDtypeStruct((B, 1), jnp.float32)),
        grid_spec=pl.GridSpec(
            grid=(row_tiles, col_tiles),
            in_specs=[pl.BlockSpec((tb, cb), lambda i, j: (i, j))],
            out_specs=(pl.BlockSpec((tb, 1), lambda i, j: (i, 0)),
                       pl.BlockSpec((tb, 1), lambda i, j: (i, 0))),
        ),
        compiler_params=pltpu.CompilerParams(
            dimension_semantics=("parallel", "arbitrary"),
            vmem_limit_bytes=vmem_limit,
        ),
    )(flat)

    out = pl.pallas_call(
        _apply_kernel,
        out_shape=jax.ShapeDtypeStruct((B, N), flat.dtype),
        grid_spec=pl.GridSpec(
            grid=(row_tiles, col_tiles),
            in_specs=[pl.BlockSpec((tb, cb), lambda i, j: (i, j)),
                      pl.BlockSpec((tb, 1), lambda i, j: (i, 0)),
                      pl.BlockSpec((tb, 1), lambda i, j: (i, 0))],
            out_specs=pl.BlockSpec((tb, cb), lambda i, j: (i, j)),
        ),
        compiler_params=pltpu.CompilerParams(
            dimension_semantics=("parallel", "parallel"),
            vmem_limit_bytes=vmem_limit,
        ),
    )(flat, mins, maxs)
    return out


# ---------------------------------------------------------------------------
# Wrapper: reproduces NormBlock.forward.
# ---------------------------------------------------------------------------
def norm_block_forward(x, frame_len, *, force_two_pass=False, col_block=None):
    """x: (B, C, H, W) float array (NCHW).  Returns (-1, 8, frame_len)."""
    B = x.shape[0]
    flat = x.reshape(B, -1)            # row-major, same as torch .view(B, -1)
    N = flat.shape[1]
    itemsize = flat.dtype.itemsize
    bytes_per_row = N * itemsize

    # Smallest legal row tile: a multiple of 8, or the full batch if B < 8.
    min_tb = B if B < 8 else 8
    two_pass = force_two_pass or (min_tb * bytes_per_row > _MAX_BLOCK_BYTES)

    if not two_pass:
        # ---- single-pass row-tiled path ----
        target_rows = max(1, _TARGET_BLOCK_BYTES // bytes_per_row)
        TB = (target_rows // 8) * 8
        if TB < 8:
            TB = 8
        if TB >= B:
            if B > 8:
                # Keep >= 2 grid blocks so the "parallel" axis can shard across
                # the two TensorCores of a v7x chip.
                half_rows = -(-B // 2)                  # ceil(B / 2)
                half_rows = -(-half_rows // 8) * 8      # round up to multiple of 8
                TB = half_rows if half_rows < B else B
            else:
                TB = B
        grid = (pl.cdiv(B, TB),)

        out = pl.pallas_call(
            _norm_rows_kernel,
            out_shape=jax.ShapeDtypeStruct((B, N), flat.dtype),
            grid_spec=pl.GridSpec(
                grid=grid,
                in_specs=[pl.BlockSpec((TB, N), lambda i: (i, 0))],
                out_specs=pl.BlockSpec((TB, N), lambda i: (i, 0)),
            ),
            compiler_params=pltpu.CompilerParams(
                dimension_semantics=("parallel",),
                vmem_limit_bytes=_VMEM_LIMIT_BYTES,
            ),
        )(flat)
    else:
        # ---- column-tiled two-pass fallback for very large rows ----
        TB = B if B < 8 else 8
        if col_block is None:
            cb = max(128, (_TARGET_BLOCK_BYTES // (TB * itemsize)) // 128 * 128)
            cb = min(cb, -(-N // 128) * 128)
        else:
            cb = col_block
        out = _two_pass_norm(flat, TB, cb, _VMEM_LIMIT_BYTES)

    # Same as torch .view(-1, 8, frame_len)
    return out.reshape(-1, 8, frame_len)


if __name__ == "__main__":
    key = jax.random.PRNGKey(0)
    k1, k2 = jax.random.split(key)

    def _reference(x, frame_len):
        b = x.shape[0]
        flat = x.reshape(b, -1).astype(jnp.float32)
        flat = flat - jnp.min(flat, axis=1, keepdims=True)
        flat = flat / jnp.max(flat, axis=1, keepdims=True)
        return flat.reshape(-1, 8, frame_len)

    # Test 1: main single-pass path, lane-dense N (B=2, C=4, H=16, W=16 -> N=1024).
    x1 = jax.random.normal(k1, (2, 4, 16, 16), dtype=jnp.float32)
    y1 = norm_block_forward(x1, 128)
    jax.block_until_ready(y1)
    r1 = _reference(x1, 128)
    assert y1.shape == r1.shape
    assert jnp.allclose(y1, r1, atol=1e-6), "mismatch vs reference (test 1)"

    # Test 2: N = 800 (NOT a multiple of 128) — unpadded full-row block, no
    # wrapper pad/slice (B=4, C=2, H=10, W=40, frame_len=100).
    x2 = jax.random.normal(k2, (4, 2, 10, 40), dtype=jnp.float32)
    y2 = norm_block_forward(x2, 100)
    jax.block_until_ready(y2)
    r2 = _reference(x2, 100)
    assert y2.shape == r2.shape
    assert jnp.allclose(y2, r2, atol=1e-6), "mismatch vs reference (test 2)"

    # Test 3: force the column-tiled two-pass fallback (with a partial tail
    # column block) on the same data to validate the large-N path.
    y3 = norm_block_forward(x2, 100, force_two_pass=True, col_block=256)
    jax.block_until_ready(y3)
    assert jnp.allclose(y3, r2, atol=1e-6), "mismatch vs reference (test 3)"

    print("KERNEL_OK")
</pallas_src>

<mosaic_0001>
module attributes {stable_mosaic.version = 11 : i64} {
  func.func @_norm_rows_kernel(%arg0: i32, %arg1: memref<2x1024xf32, #tpu.memory_space<vmem>>, %arg2: memref<2x1024xf32, #tpu.memory_space<vmem>>) attributes {dimension_semantics = [#tpu.dimension_semantics<parallel>], iteration_bounds = array<i64: 1>, scalar_prefetch = 0 : i64, scratch_operands = 0 : i64, tpu.core_type = #tpu.core_type<tc>, window_params = [{transform_indices = @transform_0, window_bounds = array<i64: 2, 1024>}, {transform_indices = @transform_1, window_bounds = array<i64: 2, 1024>}]} {
    %c0 = arith.constant 0 : index
    %c0_0 = arith.constant 0 : index
    %0 = vector.load %arg1[%c0, %c0_0] : memref<2x1024xf32, #tpu.memory_space<vmem>>, vector<2x1024xf32>
    %cst = arith.constant dense<0x7F800000> : vector<2xf32>
    %1 = vector.multi_reduction <minimumf>, %0, %cst [1] : vector<2x1024xf32> to vector<2xf32>
    %2 = vector.shape_cast %1 : vector<2xf32> to vector<2x1xf32>
    %cst_1 = arith.constant dense<0xFF800000> : vector<2xf32>
    %3 = vector.multi_reduction <maximumf>, %0, %cst_1 [1] : vector<2x1024xf32> to vector<2xf32>
    %4 = vector.shape_cast %3 : vector<2xf32> to vector<2x1xf32>
    %5 = arith.subf %4, %2 : vector<2x1xf32>
    %cst_2 = arith.constant 1.000000e+00 : f32
    %6 = vector.broadcast %cst_2 : f32 to vector<2x1xf32>
    %7 = arith.divf %6, %5 : vector<2x1xf32>
    %8 = vector.broadcast %2 : vector<2x1xf32> to vector<2x1024xf32>
    %9 = arith.subf %0, %8 : vector<2x1024xf32>
    %10 = vector.broadcast %7 : vector<2x1xf32> to vector<2x1024xf32>
    %11 = arith.mulf %9, %10 : vector<2x1024xf32>
    %c0_3 = arith.constant 0 : index
    %c0_4 = arith.constant 0 : index
    %12 = vector.load %arg2[%c0_3, %c0_4] : memref<2x1024xf32, #tpu.memory_space<vmem>>, vector<2x1024xf32>
    tpu.vector_store %arg2[%c0_3, %c0_4], %11 {strides = array<i32>} : memref<2x1024xf32, #tpu.memory_space<vmem>>, vector<2x1024xf32>,
    return
  }
  func.func @transform_0(%arg0: i32) -> (i32, i32) {
    %c0_i32 = arith.constant 0 : i32
    %c0_i32_0 = arith.constant 0 : i32
    return %arg0, %c0_i32 : i32, i32
  }
  func.func @transform_1(%arg0: i32) -> (i32, i32) {
    %c0_i32 = arith.constant 0 : i32
    %c0_i32_0 = arith.constant 0 : i32
    return %arg0, %c0_i32 : i32, i32
  }
}

</mosaic_0001>

<llo_original>
// kernel: tpu_custom_call.1
$region0: #{tpu_custom_call.1}
  #allocation0 [shape = 'u32[]', space=smem, size = 0x4, offset = 0x4, fixed_abs, tag = 'smem constant byte address 0x4 - core index']
  #allocation1 [shape = 'u32[144,128]{1,0:T(1,128)}', space=vmem, size = 0x12000, scoped, tag = 'internal scratch']
  %s0 = inlined_call_operand.hbm [shape: f32[2,1024], index: 0, kind: input, shape index: {}]
  %s1 = inlined_call_operand.hbm [shape: f32[2,1024], index: 1, kind: output, shape index: {}]
  %s2 = sld [smem:[#allocation0]]
  $region18: #{tpu_custom_call.1} parent=0
    _
  %s4 = ssub.s32 1, %s2
  %s5 = scalar_select 0, %s4, %s2
  $region1: #{tpu_custom_call.1} parent=0
    #allocation2 [shape = 'u8[8192]{0}', space=vmem, size = 0x2000, scoped, tag = 'input window, operand 0, single buffered']
    #allocation3 [shape = 's32[1]{0}', space=sflag, size = 0x4, scoped, tag = 'scoped memory for tpu_custom_call.1']
    #allocation4 [shape = 's32[1]{0}', space=sflag, size = 0x4, scoped, tag = 'scoped memory for tpu_custom_call.1']
    #allocation5 [shape = 'u8[8192]{0}', space=vmem, size = 0x2000, scoped, tag = 'output window, operand 0, single buffered']
    %6 = vsyncpa [#allocation3], 0
    %7 = vsyncpa [#allocation4], 0
    // Predicated region
    $region2: #{tpu_custom_call.1} parent=1 // pred_check
      _
    $region3: #{tpu_custom_call.1} parent=1 // pred_check_branch
      %9 = sbr.rel (0) target = $region5
    $region4: #{tpu_custom_call.1} parent=1 // pred_region
      %s11 = ssub.s32 256, 256
      %12 = vsyncadd [#allocation3], %s11
      %s14 = sshll.u32 [#allocation2], 4
      %s15 = int_to_ptr.vmem [resolvable:$true] %s14
      %17 = dma.hbm_to_vmem [thread:$0]  %s0, 256, %s15, [#allocation3]
    $region5: #{tpu_custom_call.1} parent=1 // pred_fallthru
      _
    // Predicated region
    $region6: #{tpu_custom_call.1} parent=1 // pred_check
      _
    $region7: #{tpu_custom_call.1} parent=1 // pred_check_branch
      %19 = sbr.rel (0) target = $region9
    $region8: #{tpu_custom_call.1} parent=1 // pred_region
      %20 = dma.done [#allocation3], 256
    $region9: #{tpu_custom_call.1} parent=1 // pred_fallthru
      _
    %v21 = vld [vmem:[#allocation2] sm:$0xff]
    %v22 = vld [vmem:[#allocation2 + $0x8] sm:$0xff]
    %v25 = vcombine.high %v21, %v21
    %v27 = vunpack.c.l.s4 1983009808
    %v28 = vunpack.c.0.s8 %v27
    %v29 = vlaneseq
    %v30 = vshrl.u32 %v29, 7
    %v31 = vsub.s32 %v28, %v30
    %v32 = vrot.slane %v21, %v31
    %v34 = vunpack.c.l.s4 1983009808
    %v35 = vunpack.c.0.s8 %v34
    %v36 = vlaneseq
    %v37 = vshrl.u32 %v36, 7
    %v38 = vsub.s32 %v35, %v37
    %v39 = vrot.slane %v25, %v38
    %v40 = vcombine.high %v32, %v32
    %v41 = vcombine.high %v39, %v39
    %v42 = vcombine.high %v22, %v22
    %v44 = vunpack.c.l.s4 1983009808
    %v45 = vunpack.c.0.s8 %v44
    %v46 = vlaneseq
    %v47 = vshrl.u32 %v46, 7
    %v48 = vsub.s32 %v45, %v47
    %v49 = vrot.slane %v22, %v48
    %v51 = vunpack.c.l.s4 1983009808
    %v52 = vunpack.c.0.s8 %v51
    %v53 = vlaneseq
    %v54 = vshrl.u32 %v53, 7
    %v55 = vsub.s32 %v52, %v54
    %v56 = vrot.slane %v42, %v55
    %v57 = vcombine.high %v49, %v49
    %v58 = vcombine.high %v56, %v56
    %vm67 = vcmask 1041408
    %v68 = vsel %vm67, %v32, inf
    %v69 = vsel %vm67, %v40, inf
    %v70 = vsel %vm67, %v39, inf
    %v71 = vsel %vm67, %v41, inf
    %v72 = vsel %vm67, %v49, inf
    %v73 = vmin.f32 %v68, %v72
    %v74 = vsel %vm67, %v57, inf
    %v75 = vmin.f32 %v69, %v74
    %v76 = vsel %vm67, %v56, inf
    %v77 = vmin.f32 %v70, %v76
    %v78 = vsel %vm67, %v58, inf
    %v79 = vmin.f32 %v71, %v78
    %v80 = vmin.f32 %v73, %v75
    %v81 = vmin.f32 %v77, %v79
    %v82 = vmin.f32 %v80, %v81
    %83 = vmin.xlane.f32.xlu0 %v82
    %v84 = vpop.xlane.xlu0 %83
    %v85 = vsel %vm67, %v32, -inf
    %v86 = vsel %vm67, %v40, -inf
    %v87 = vsel %vm67, %v39, -inf
    %v88 = vsel %vm67, %v41, -inf
    %v89 = vsel %vm67, %v49, -inf
    %v90 = vmax.f32 %v85, %v89
    %v91 = vsel %vm67, %v57, -inf
    %v92 = vmax.f32 %v86, %v91
    %v93 = vsel %vm67, %v56, -inf
    %v94 = vmax.f32 %v87, %v93
    %v95 = vsel %vm67, %v58, -inf
    %v96 = vmax.f32 %v88, %v95
    %v97 = vmax.f32 %v90, %v92
    %v98 = vmax.f32 %v94, %v96
    %v99 = vmax.f32 %v97, %v98
    %100 = vmax.xlane.f32.xlu0 %v99
    %v101 = vpop.xlane.xlu0 %100
    %v102 = vsub.f32 %v101, %v84
    %v103 = vrcp.pop %v102
    %v104 = vmul.f32 1.0, %v103
    %v107 = vunpack.c.l.s4 269488144
    %v108 = vunpack.c.0.s8 %v107
    %v109 = vlaneseq
    %v110 = vshrl.u32 %v109, 7
    %v111 = vsub.s32 %v108, %v110
    %v112 = vrot.slane %v84, %v111
    %v114 = vsub.f32 %v21, %v112
    %v115 = vsub.f32 %v22, %v112
    %v118 = vunpack.c.l.s4 269488144
    %v119 = vunpack.c.0.s8 %v118
    %v120 = vlaneseq
    %v121 = vshrl.u32 %v120, 7
    %v122 = vsub.s32 %v119, %v121
    %v123 = vrot.slane %v104, %v122
    %v125 = vmul.f32 %v114, %v123
    %v126 = vmul.f32 %v115, %v123
    %127 = vst [vmem:[#allocation5] sm:$0xff] %v125
    %128 = vst [vmem:[#allocation5 + $0x8] sm:$0xff] %v126
    // Predicated region
    $region10: #{tpu_custom_call.1} parent=1 // pred_check
      _
    $region11: #{tpu_custom_call.1} parent=1 // pred_check_branch
      %130 = sbr.rel (0) target = $region13
    $region12: #{tpu_custom_call.1} parent=1 // pred_region
      %s132 = ssub.s32 256, 256
      %133 = vsyncadd [#allocation4], %s132
      %s135 = sshll.u32 [#allocation5], 4
      %s136 = int_to_ptr.vmem [resolvable:$true] %s135
      %138 = dma.vmem_to_hbm [thread:$0]  %s136, 256, %s1, [#allocation4]
    $region13: #{tpu_custom_call.1} parent=1 // pred_fallthru
      _
    // Predicated region
    $region14: #{tpu_custom_call.1} parent=1 // pred_check
      _
    $region15: #{tpu_custom_call.1} parent=1 // pred_check_branch
      %140 = sbr.rel (0) target = $region17
    $region16: #{tpu_custom_call.1} parent=1 // pred_region
      %141 = dma.done [#allocation4], 256
    $region17: #{tpu_custom_call.1} parent=1 // pred_fallthru
      _
    %142 = vsyncpa [#allocation3], 1
    %143 = vsyncpa [#allocation4], 1

</llo_original>
